<compile_context>
chip_gen: v7x
topology: tpu7x:2x2x1
jax: 0.10.0
libtpu: 0.0.40
codegen_flags: <defaults>
</compile_context>

<pallas_src>
import jax
import jax.numpy as jnp
from jax.experimental import pallas as pl
from jax.experimental.pallas import tpu as pltpu


def _round_up(a, b):
    return -(-a // b) * b


def _make_stochastic_pool_kernel(kk):
    """kernel over blocks: x (kk*8, bn), u (8, bn) -> o (8, bn)."""

    def kernel(x_ref, u_ref, o_ref):
        # Candidate i lives in sublane rows [8*i, 8*i+8) -> dense (8, bn) tiles.
        xs = [x_ref[8 * i:8 * (i + 1), :] for i in range(kk)]
        ws = [jnp.where(xi > 0, xi, jnp.ones_like(xi)) for xi in xs]

        total = ws[0]
        for i in range(1, kk):
            total = total + ws[i]

        thresh = u_ref[...] * total            # in [0, total)

        # Inverse-CDF categorical sample as a select chain.  The final
        # candidate is the fall-through, so rounding (thresh >= cumsum) can
        # never produce a value outside the window.
        sel = xs[0]
        run = ws[0]
        for i in range(1, kk):
            sel = jnp.where(run <= thresh, xs[i], sel)
            if i < kk - 1:
                run = run + ws[i]

        o_ref[...] = sel

    return kernel


def stochastic_pool2d(x, key, kernel_size=2, stride=2, block_n=32768):
    """x: (B, C, H, W) float32 -> (B, C, oh, ow) float32."""
    x = x.astype(jnp.float32)
    B, C, H, W = x.shape
    oh = (H - kernel_size) // stride + 1
    ow = (W - kernel_size) // stride + 1
    kk = kernel_size * kernel_size
    N = B * C * oh * ow

    # Window candidates via strided basic slices (no gathers).  Candidate
    # order (ki, kj) matches torch's unfold/unfold + reshape(-1, kk).
    cands = []
    for ki in range(kernel_size):
        for kj in range(kernel_size):
            c = x[:, :,
                  ki:ki + (oh - 1) * stride + 1:stride,
                  kj:kj + (ow - 1) * stride + 1:stride]          # (B,C,oh,ow)
            cands.append(c.reshape(-1))
    xw = jnp.stack(cands, axis=0)                                # (kk, N)

    # Repack to 8-sublane groups per candidate: (kk, 8*M) -> (kk*8, M) where
    # row i*8+g, lane m holds candidate i of window n = g*M + m.
    G = 8
    m_needed = _round_up(N, G) // G
    bn = min(block_n, _round_up(max(m_needed, 1), 128))          # lane-dense blocks
    M = _round_up(m_needed, bn)
    Np = G * M
    xw = jnp.pad(xw, ((0, 0), (0, Np - N)), constant_values=1.0)
    xs = xw.reshape(kk * G, M)

    # One uniform in [0, 1) per window, laid out to match the output slab.
    u = jax.random.uniform(key, (G, M), dtype=jnp.float32)

    grid = (M // bn,)
    out = pl.pallas_call(
        _make_stochastic_pool_kernel(kk),
        out_shape=jax.ShapeDtypeStruct((G, M), jnp.float32),
        grid_spec=pltpu.PrefetchScalarGridSpec(
            num_scalar_prefetch=0,
            grid=grid,
            in_specs=[
                pl.BlockSpec((kk * G, bn), lambda j: (0, j)),
                pl.BlockSpec((G, bn), lambda j: (0, j)),
            ],
            out_specs=pl.BlockSpec((G, bn), lambda j: (0, j)),
        ),
        compiler_params=pltpu.CompilerParams(
            dimension_semantics=("parallel",),
            vmem_limit_bytes=32 * 1024 * 1024),
    )(xs, u)

    # out[g, m] is the pooled value of window n = g*M + m.
    return out.reshape(Np)[:N].reshape(B, C, oh, ow)


if __name__ == "__main__":
    key = jax.random.PRNGKey(0)
    xkey, skey = jax.random.split(key)
    B, C, H, W = 2, 4, 16, 16
    x = jax.random.normal(xkey, (B, C, H, W), dtype=jnp.float32)

    y = stochastic_pool2d(x, skey, kernel_size=2, stride=2)
    y = jax.block_until_ready(y)

    # Sanity: shape, and every output value must be a member of its 2x2 window.
    assert y.shape == (B, C, H // 2, W // 2)
    win = x.reshape(B, C, H // 2, 2, W // 2, 2).transpose(0, 1, 2, 4, 3, 5)
    win = win.reshape(B, C, H // 2, W // 2, 4)
    member = jnp.any(jnp.isclose(win, y[..., None]), axis=-1)
    assert bool(jnp.all(member))

    print("KERNEL_OK")
</pallas_src>

<mosaic_0001>
module attributes {stable_mosaic.version = 11 : i64} {
  func.func @kernel(%arg0: i32, %arg1: memref<32x128xf32, #tpu.memory_space<vmem>>, %arg2: memref<8x128xf32, #tpu.memory_space<vmem>>, %arg3: memref<8x128xf32, #tpu.memory_space<vmem>>) attributes {dimension_semantics = [#tpu.dimension_semantics<parallel>], iteration_bounds = array<i64: 1>, scalar_prefetch = 0 : i64, scratch_operands = 0 : i64, tpu.core_type = #tpu.core_type<tc>, window_params = [{transform_indices = @transform_0, window_bounds = array<i64: 32, 128>}, {transform_indices = @transform_1, window_bounds = array<i64: 8, 128>}, {transform_indices = @transform_2, window_bounds = array<i64: 8, 128>}]} {
    %c0 = arith.constant 0 : index
    %c0_0 = arith.constant 0 : index
    %0 = vector.load %arg1[%c0, %c0_0] : memref<32x128xf32, #tpu.memory_space<vmem>>, vector<8x128xf32>
    %c8 = arith.constant 8 : index
    %c0_1 = arith.constant 0 : index
    %1 = vector.load %arg1[%c8, %c0_1] : memref<32x128xf32, #tpu.memory_space<vmem>>, vector<8x128xf32>
    %c16 = arith.constant 16 : index
    %c0_2 = arith.constant 0 : index
    %2 = vector.load %arg1[%c16, %c0_2] : memref<32x128xf32, #tpu.memory_space<vmem>>, vector<8x128xf32>
    %c24 = arith.constant 24 : index
    %c0_3 = arith.constant 0 : index
    %3 = vector.load %arg1[%c24, %c0_3] : memref<32x128xf32, #tpu.memory_space<vmem>>, vector<8x128xf32>
    %cst = arith.constant 0.000000e+00 : f32
    %4 = vector.broadcast %cst : f32 to vector<8x128xf32>
    %5 = arith.cmpf ogt, %0, %4 : vector<8x128xf32>
    %cst_4 = arith.constant 1.000000e+00 : f32
    %6 = vector.broadcast %cst_4 : f32 to vector<8x128xf32>
    %7 = arith.select %5, %0, %6 : vector<8x128xi1>, vector<8x128xf32>
    %cst_5 = arith.constant 0.000000e+00 : f32
    %8 = vector.broadcast %cst_5 : f32 to vector<8x128xf32>
    %9 = arith.cmpf ogt, %1, %8 : vector<8x128xf32>
    %cst_6 = arith.constant 1.000000e+00 : f32
    %10 = vector.broadcast %cst_6 : f32 to vector<8x128xf32>
    %11 = arith.select %9, %1, %10 : vector<8x128xi1>, vector<8x128xf32>
    %cst_7 = arith.constant 0.000000e+00 : f32
    %12 = vector.broadcast %cst_7 : f32 to vector<8x128xf32>
    %13 = arith.cmpf ogt, %2, %12 : vector<8x128xf32>
    %cst_8 = arith.constant 1.000000e+00 : f32
    %14 = vector.broadcast %cst_8 : f32 to vector<8x128xf32>
    %15 = arith.select %13, %2, %14 : vector<8x128xi1>, vector<8x128xf32>
    %cst_9 = arith.constant 0.000000e+00 : f32
    %16 = vector.broadcast %cst_9 : f32 to vector<8x128xf32>
    %17 = arith.cmpf ogt, %3, %16 : vector<8x128xf32>
    %cst_10 = arith.constant 1.000000e+00 : f32
    %18 = vector.broadcast %cst_10 : f32 to vector<8x128xf32>
    %19 = arith.select %17, %3, %18 : vector<8x128xi1>, vector<8x128xf32>
    %20 = arith.addf %7, %11 : vector<8x128xf32>
    %21 = arith.addf %20, %15 : vector<8x128xf32>
    %22 = arith.addf %21, %19 : vector<8x128xf32>
    %c0_11 = arith.constant 0 : index
    %c0_12 = arith.constant 0 : index
    %23 = vector.load %arg2[%c0_11, %c0_12] : memref<8x128xf32, #tpu.memory_space<vmem>>, vector<8x128xf32>
    %24 = arith.mulf %23, %22 : vector<8x128xf32>
    %25 = arith.cmpf ole, %7, %24 : vector<8x128xf32>
    %26 = arith.select %25, %1, %0 : vector<8x128xi1>, vector<8x128xf32>
    %27 = arith.addf %7, %11 : vector<8x128xf32>
    %28 = arith.cmpf ole, %27, %24 : vector<8x128xf32>
    %29 = arith.select %28, %2, %26 : vector<8x128xi1>, vector<8x128xf32>
    %30 = arith.addf %27, %15 : vector<8x128xf32>
    %31 = arith.cmpf ole, %30, %24 : vector<8x128xf32>
    %32 = arith.select %31, %3, %29 : vector<8x128xi1>, vector<8x128xf32>
    %c0_13 = arith.constant 0 : index
    %c0_14 = arith.constant 0 : index
    %33 = vector.load %arg3[%c0_13, %c0_14] : memref<8x128xf32, #tpu.memory_space<vmem>>, vector<8x128xf32>
    tpu.vector_store %arg3[%c0_13, %c0_14], %32 {strides = array<i32>} : memref<8x128xf32, #tpu.memory_space<vmem>>, vector<8x128xf32>,
    return
  }
  func.func @transform_0(%arg0: i32) -> (i32, i32) {
    %c0_i32 = arith.constant 0 : i32
    %c0_i32_0 = arith.constant 0 : i32
    return %c0_i32, %arg0 : i32, i32
  }
  func.func @transform_1(%arg0: i32) -> (i32, i32) {
    %c0_i32 = arith.constant 0 : i32
    %c0_i32_0 = arith.constant 0 : i32
    return %c0_i32, %arg0 : i32, i32
  }
  func.func @transform_2(%arg0: i32) -> (i32, i32) {
    %c0_i32 = arith.constant 0 : i32
    %c0_i32_0 = arith.constant 0 : i32
    return %c0_i32, %arg0 : i32, i32
  }
}

</mosaic_0001>

<llo_original>
// kernel: tpu_custom_call.1
$region0: #{tpu_custom_call.1}
  #allocation0 [shape = 'u32[]', space=smem, size = 0x4, offset = 0x4, fixed_abs, tag = 'smem constant byte address 0x4 - core index']
  #allocation1 [shape = 'u32[144,128]{1,0:T(1,128)}', space=vmem, size = 0x12000, scoped, tag = 'internal scratch']
  %s0 = inlined_call_operand.hbm [shape: f32[32,128], index: 0, kind: input, shape index: {}]
  %s1 = inlined_call_operand.hbm [shape: f32[8,128], index: 1, kind: input, shape index: {}]
  %s2 = inlined_call_operand.hbm [shape: f32[8,128], index: 2, kind: output, shape index: {}]
  %s3 = sld [smem:[#allocation0]]
  $region26: #{tpu_custom_call.1} parent=0
    _
  %s5 = ssub.s32 1, %s3
  %s6 = scalar_select 0, %s5, %s3
  $region1: #{tpu_custom_call.1} parent=0
    #allocation2 [shape = 'u8[16384]{0}', space=vmem, size = 0x4000, scoped, tag = 'input window, operand 0, single buffered']
    #allocation3 [shape = 's32[1]{0}', space=sflag, size = 0x4, scoped, tag = 'scoped memory for tpu_custom_call.1']
    #allocation4 [shape = 's32[1]{0}', space=sflag, size = 0x4, scoped, tag = 'scoped memory for tpu_custom_call.1']
    #allocation5 [shape = 'u8[4096]{0}', space=vmem, size = 0x1000, scoped, tag = 'input window, operand 1, single buffered']
    #allocation6 [shape = 's32[1]{0}', space=sflag, size = 0x4, scoped, tag = 'scoped memory for tpu_custom_call.1']
    #allocation7 [shape = 'u8[4096]{0}', space=vmem, size = 0x1000, scoped, tag = 'output window, operand 0, single buffered']
    %7 = vsyncpa [#allocation3], 0
    %8 = vsyncpa [#allocation6], 0
    %9 = vsyncpa [#allocation4], 0
    // Predicated region
    $region2: #{tpu_custom_call.1} parent=1 // pred_check
      _
    $region3: #{tpu_custom_call.1} parent=1 // pred_check_branch
      %11 = sbr.rel (0) target = $region5
    $region4: #{tpu_custom_call.1} parent=1 // pred_region
      %s13 = ssub.s32 512, 512
      %14 = vsyncadd [#allocation3], %s13
      %s15 = sshll.u32 [#allocation2], 4
      %s16 = int_to_ptr.vmem [resolvable:$true] %s15
      %21 = dma.hbm_to_vmem [thread:$0]  %s0, 512, %s16, [#allocation3], 128, 128, 8
    $region5: #{tpu_custom_call.1} parent=1 // pred_fallthru
      _
    // Predicated region
    $region6: #{tpu_custom_call.1} parent=1 // pred_check
      _
    $region7: #{tpu_custom_call.1} parent=1 // pred_check_branch
      %23 = sbr.rel (0) target = $region9
    $region8: #{tpu_custom_call.1} parent=1 // pred_region
      %s25 = ssub.s32 128, 128
      %26 = vsyncadd [#allocation6], %s25
      %s28 = sshll.u32 [#allocation5], 4
      %s29 = int_to_ptr.vmem [resolvable:$true] %s28
      %31 = dma.hbm_to_vmem [thread:$0]  %s1, 128, %s29, [#allocation6]
    $region9: #{tpu_custom_call.1} parent=1 // pred_fallthru
      _
    // Predicated region
    $region10: #{tpu_custom_call.1} parent=1 // pred_check
      _
    $region11: #{tpu_custom_call.1} parent=1 // pred_check_branch
      %33 = sbr.rel (0) target = $region13
    $region12: #{tpu_custom_call.1} parent=1 // pred_region
      %34 = dma.done [#allocation3], 512
    $region13: #{tpu_custom_call.1} parent=1 // pred_fallthru
      _
    // Predicated region
    $region14: #{tpu_custom_call.1} parent=1 // pred_check
      _
    $region15: #{tpu_custom_call.1} parent=1 // pred_check_branch
      %36 = sbr.rel (0) target = $region17
    $region16: #{tpu_custom_call.1} parent=1 // pred_region
      %37 = dma.done [#allocation6], 128
    $region17: #{tpu_custom_call.1} parent=1 // pred_fallthru
      _
    %v38 = vld [vmem:[#allocation2] sm:$0xff]
    %v39 = vld [vmem:[#allocation2 + $0x8] sm:$0xff]
    %v40 = vld [vmem:[#allocation2 + $0x10] sm:$0xff]
    %v41 = vld [vmem:[#allocation2 + $0x18] sm:$0xff]
    %vm42 = vcmp.gt.f32.partialorder %v38, 0.0
    %v43 = vsel %vm42, %v38, 1.0
    %vm44 = vcmp.gt.f32.partialorder %v39, 0.0
    %v45 = vsel %vm44, %v39, 1.0
    %vm46 = vcmp.gt.f32.partialorder %v40, 0.0
    %v47 = vsel %vm46, %v40, 1.0
    %vm48 = vcmp.gt.f32.partialorder %v41, 0.0
    %v49 = vsel %vm48, %v41, 1.0
    %v50 = vadd.f32 %v43, %v45
    %v51 = vadd.f32 %v50, %v47
    %v52 = vadd.f32 %v51, %v49
    %v53 = vld [vmem:[#allocation5] sm:$0xff]
    %v54 = vmul.f32 %v53, %v52
    %vm55 = vcmp.le.f32.partialorder %v43, %v54
    %v56 = vsel %vm55, %v39, %v38
    %vm57 = vcmp.le.f32.partialorder %v50, %v54
    %v58 = vsel %vm57, %v40, %v56
    %vm59 = vcmp.le.f32.partialorder %v51, %v54
    %v60 = vsel %vm59, %v41, %v58
    %61 = vst [vmem:[#allocation7] sm:$0xff] %v60
    // Predicated region
    $region18: #{tpu_custom_call.1} parent=1 // pred_check
      _
    $region19: #{tpu_custom_call.1} parent=1 // pred_check_branch
      %63 = sbr.rel (0) target = $region21
    $region20: #{tpu_custom_call.1} parent=1 // pred_region
      %s65 = ssub.s32 128, 128
      %66 = vsyncadd [#allocation4], %s65
      %s68 = sshll.u32 [#allocation7], 4
      %s69 = int_to_ptr.vmem [resolvable:$true] %s68
      %71 = dma.vmem_to_hbm [thread:$0]  %s69, 128, %s2, [#allocation4]
    $region21: #{tpu_custom_call.1} parent=1 // pred_fallthru
      _
    // Predicated region
    $region22: #{tpu_custom_call.1} parent=1 // pred_check
      _
    $region23: #{tpu_custom_call.1} parent=1 // pred_check_branch
      %73 = sbr.rel (0) target = $region25
    $region24: #{tpu_custom_call.1} parent=1 // pred_region
      %74 = dma.done [#allocation4], 128
    $region25: #{tpu_custom_call.1} parent=1 // pred_fallthru
      _
    %75 = vsyncpa [#allocation3], 1
    %76 = vsyncpa [#allocation6], 1
    %77 = vsyncpa [#allocation4], 1

</llo_original>
